<compile_context>
chip_gen: v6e
topology: v6e:2x2x1
jax: 0.10.0
libtpu: 0.0.40
codegen_flags: <defaults>
</compile_context>

<pallas_src>
import jax
import jax.numpy as jnp
from jax.experimental import pallas as pl
from jax.experimental.pallas import tpu as pltpu


def pdseir_kernel(x_ref, p_ref, sig_ref, o_ref):
    # All refs are SMEM; every read/write below is a scalar op.
    S0 = x_ref[0]
    E0 = x_ref[1]
    I0 = x_ref[2]
    R0 = x_ref[3]
    S1 = x_ref[4]
    E1 = x_ref[5]
    I1 = x_ref[6]
    R1 = x_ref[7]
    t = x_ref[8]

    p0 = p_ref[0]
    p1 = p_ref[1]
    p2 = p_ref[2]
    # p3 is intentionally unused: the reference's seg4 term (p3 - p3) == 0.
    p4 = p_ref[4]
    p5 = p_ref[5]
    p6 = p_ref[6]
    p7 = p_ref[7]

    sigma = sig_ref[0]

    zero = jnp.float32(0.0)
    inv11 = jnp.float32(1.0 / 11.0)   # 1 / (15 - 4)
    inv15 = jnp.float32(1.0 / 15.0)   # 1 / (30 - 15)
    inv20 = jnp.float32(1.0 / 20.0)   # 1 / (50 - 30)

    # Piecewise-linear schedules (torch's python `if t <= ...` branches become
    # scalar selects; branches are side-effect free so semantics match).
    def beta(tt):
        seg1 = jnp.maximum(zero, p0)
        seg2 = jnp.maximum(zero, p0 + (p1 - p0) * (tt - 4.0) * inv11)
        seg3 = jnp.maximum(zero, p1 + (p2 - p1) * (tt - 15.0) * inv15)
        seg4 = jnp.maximum(zero, p2)   # (p3 - p3) * (...) is identically 0
        return jnp.where(
            tt <= 4.0, seg1,
            jnp.where(tt <= 15.0, seg2,
                      jnp.where(tt <= 30.0, seg3, seg4)))

    def gamma(tt):
        seg1 = jnp.maximum(zero, p4)
        seg2 = jnp.maximum(zero, p4 + (p5 - p4) * (tt - 4.0) * inv11)
        seg3 = jnp.maximum(zero, p5 + (p6 - p5) * (tt - 15.0) * inv15)
        seg4 = jnp.maximum(zero, p6 + (p7 - p6) * (tt - 30.0) * inv20)
        return jnp.where(
            tt <= 4.0, seg1,
            jnp.where(tt <= 15.0, seg2,
                      jnp.where(tt <= 30.0, seg3, seg4)))

    N = S0 + E0 + I0 + R0
    inv_N = 1.0 / N               # single divide, reused for all '/ N' terms

    b_t = beta(t)
    b_t1 = beta(t + 1.0)
    g_t1 = gamma(t + 1.0)

    one_m_sigma = 1.0 - sigma

    preE_1 = one_m_sigma * E0 + b_t * (I0 + E0) * S0 * inv_N
    preS = (1.0 - b_t1 * I1 * inv_N) * S1
    preE = one_m_sigma * E1 + b_t1 * (I1 + E1) * S1 * inv_N
    preI = (1.0 - g_t1) * I1 + sigma * preE_1
    preR = R1 + g_t1 * I1

    o_ref[0] = preS
    o_ref[1] = preE
    o_ref[2] = preI
    o_ref[3] = preR


def pdseir_forward(X, params, sigma):
    """X: (9,), params: (8,), sigma: python float or scalar -> (preS, preE, preI, preR)."""
    x = jnp.asarray(X, jnp.float32).reshape(9)
    p = jnp.asarray(params, jnp.float32).reshape(8)
    s = jnp.asarray(sigma, jnp.float32).reshape(1)
    out = pl.pallas_call(
        pdseir_kernel,
        out_shape=jax.ShapeDtypeStruct((4,), jnp.float32),
        in_specs=[
            pl.BlockSpec(memory_space=pltpu.MemorySpace.SMEM),
            pl.BlockSpec(memory_space=pltpu.MemorySpace.SMEM),
            pl.BlockSpec(memory_space=pltpu.MemorySpace.SMEM),
        ],
        out_specs=pl.BlockSpec(memory_space=pltpu.MemorySpace.SMEM),
    )(x, p, s)
    return out[0], out[1], out[2], out[3]


def _ref_forward(X, params, sigma):
    """Pure-JAX reference mirroring the PyTorch forward (divides kept as-is)."""
    S0, E0, I0, R0, S1, E1, I1, R1, t = [X[i] for i in range(9)]
    p = params

    def beta(tt):
        seg4 = jnp.maximum(0.0, p[2] + (p[3] - p[3]) * (tt - 30.0) / 20.0)
        return jnp.where(
            tt <= 4.0, jnp.maximum(0.0, p[0]),
            jnp.where(
                tt <= 15.0,
                jnp.maximum(0.0, p[0] + (p[1] - p[0]) * (tt - 4.0) / 11.0),
                jnp.where(
                    tt <= 30.0,
                    jnp.maximum(0.0, p[1] + (p[2] - p[1]) * (tt - 15.0) / 15.0),
                    seg4)))

    def gamma(tt):
        seg4 = jnp.maximum(0.0, p[6] + (p[7] - p[6]) * (tt - 30.0) / 20.0)
        return jnp.where(
            tt <= 4.0, jnp.maximum(0.0, p[4]),
            jnp.where(
                tt <= 15.0,
                jnp.maximum(0.0, p[4] + (p[5] - p[4]) * (tt - 4.0) / 11.0),
                jnp.where(
                    tt <= 30.0,
                    jnp.maximum(0.0, p[5] + (p[6] - p[5]) * (tt - 15.0) / 15.0),
                    seg4)))

    N = S0 + E0 + I0 + R0
    preE_1 = (1 - sigma) * E0 + beta(t) * (I0 + E0) * S0 / N
    preS = (1 - beta(t + 1) * I1 / N) * S1
    preE = (1 - sigma) * E1 + beta(t + 1) * (I1 + E1) * S1 / N
    preI = (1 - gamma(t + 1)) * I1 + sigma * preE_1
    preR = R1 + gamma(t + 1) * I1
    return preS, preE, preI, preR


if __name__ == "__main__":
    sigma = 0.25
    # Deterministic parameter init, identical to the module's __init__.
    params = jnp.array([0.07, 0.05, 0.02, 0.005, 0.0001, 0.001, 0.02, 0.05],
                       dtype=jnp.float32)

    key = jax.random.PRNGKey(0)
    state = jax.random.uniform(key, (8,), dtype=jnp.float32,
                               minval=10.0, maxval=1000.0)  # S0..R1 populations
    t = jnp.array([10.0], dtype=jnp.float32)
    X = jnp.concatenate([state, t])  # shape (9,)

    outs = pdseir_forward(X, params, sigma)
    outs = jax.block_until_ready(outs)

    ref = _ref_forward(X, params, sigma)
    for got, want in zip(outs, ref):
        assert jnp.allclose(got, want, rtol=1e-5, atol=1e-6), (got, want)

    print("KERNEL_OK")
</pallas_src>

<mosaic_0001>
module attributes {stable_mosaic.version = 11 : i64} {
  func.func @pdseir_kernel(%arg0: memref<9xf32, #tpu.memory_space<smem>>, %arg1: memref<8xf32, #tpu.memory_space<smem>>, %arg2: memref<1xf32, #tpu.memory_space<smem>>, %arg3: memref<4xf32, #tpu.memory_space<smem>>) attributes {dimension_semantics = [], scalar_prefetch = 0 : i64, scratch_operands = 0 : i64, tpu.core_type = #tpu.core_type<tc>} {
    %c0 = arith.constant 0 : index
    %0 = memref.load %arg0[%c0] : memref<9xf32, #tpu.memory_space<smem>>
    %c1 = arith.constant 1 : index
    %1 = memref.load %arg0[%c1] : memref<9xf32, #tpu.memory_space<smem>>
    %c2 = arith.constant 2 : index
    %2 = memref.load %arg0[%c2] : memref<9xf32, #tpu.memory_space<smem>>
    %c3 = arith.constant 3 : index
    %3 = memref.load %arg0[%c3] : memref<9xf32, #tpu.memory_space<smem>>
    %c4 = arith.constant 4 : index
    %4 = memref.load %arg0[%c4] : memref<9xf32, #tpu.memory_space<smem>>
    %c5 = arith.constant 5 : index
    %5 = memref.load %arg0[%c5] : memref<9xf32, #tpu.memory_space<smem>>
    %c6 = arith.constant 6 : index
    %6 = memref.load %arg0[%c6] : memref<9xf32, #tpu.memory_space<smem>>
    %c7 = arith.constant 7 : index
    %7 = memref.load %arg0[%c7] : memref<9xf32, #tpu.memory_space<smem>>
    %c8 = arith.constant 8 : index
    %8 = memref.load %arg0[%c8] : memref<9xf32, #tpu.memory_space<smem>>
    %c0_0 = arith.constant 0 : index
    %9 = memref.load %arg1[%c0_0] : memref<8xf32, #tpu.memory_space<smem>>
    %c1_1 = arith.constant 1 : index
    %10 = memref.load %arg1[%c1_1] : memref<8xf32, #tpu.memory_space<smem>>
    %c2_2 = arith.constant 2 : index
    %11 = memref.load %arg1[%c2_2] : memref<8xf32, #tpu.memory_space<smem>>
    %c4_3 = arith.constant 4 : index
    %12 = memref.load %arg1[%c4_3] : memref<8xf32, #tpu.memory_space<smem>>
    %c5_4 = arith.constant 5 : index
    %13 = memref.load %arg1[%c5_4] : memref<8xf32, #tpu.memory_space<smem>>
    %c6_5 = arith.constant 6 : index
    %14 = memref.load %arg1[%c6_5] : memref<8xf32, #tpu.memory_space<smem>>
    %c7_6 = arith.constant 7 : index
    %15 = memref.load %arg1[%c7_6] : memref<8xf32, #tpu.memory_space<smem>>
    %c0_7 = arith.constant 0 : index
    %16 = memref.load %arg2[%c0_7] : memref<1xf32, #tpu.memory_space<smem>>
    %17 = arith.addf %0, %1 : f32
    %18 = arith.addf %17, %2 : f32
    %19 = arith.addf %18, %3 : f32
    %cst = arith.constant 1.000000e+00 : f32
    %20 = arith.divf %cst, %19 : f32
    %cst_8 = arith.constant 0.000000e+00 : f32
    %21 = arith.maximumf %cst_8, %9 : f32
    %22 = arith.subf %10, %9 : f32
    %cst_9 = arith.constant 4.000000e+00 : f32
    %23 = arith.subf %8, %cst_9 : f32
    %24 = arith.mulf %22, %23 : f32
    %cst_10 = arith.constant 0.0909090936 : f32
    %25 = arith.mulf %24, %cst_10 : f32
    %26 = arith.addf %9, %25 : f32
    %cst_11 = arith.constant 0.000000e+00 : f32
    %27 = arith.maximumf %cst_11, %26 : f32
    %28 = arith.subf %11, %10 : f32
    %cst_12 = arith.constant 1.500000e+01 : f32
    %29 = arith.subf %8, %cst_12 : f32
    %30 = arith.mulf %28, %29 : f32
    %cst_13 = arith.constant 0.0666666701 : f32
    %31 = arith.mulf %30, %cst_13 : f32
    %32 = arith.addf %10, %31 : f32
    %cst_14 = arith.constant 0.000000e+00 : f32
    %33 = arith.maximumf %cst_14, %32 : f32
    %cst_15 = arith.constant 0.000000e+00 : f32
    %34 = arith.maximumf %cst_15, %11 : f32
    %cst_16 = arith.constant 4.000000e+00 : f32
    %35 = arith.cmpf ole, %8, %cst_16 : f32
    %cst_17 = arith.constant 1.500000e+01 : f32
    %36 = arith.cmpf ole, %8, %cst_17 : f32
    %cst_18 = arith.constant 3.000000e+01 : f32
    %37 = arith.cmpf ole, %8, %cst_18 : f32
    %38 = arith.select %37, %33, %34 : f32
    %39 = arith.select %36, %27, %38 : f32
    %40 = arith.select %35, %21, %39 : f32
    %cst_19 = arith.constant 1.000000e+00 : f32
    %41 = arith.addf %8, %cst_19 : f32
    %cst_20 = arith.constant 0.000000e+00 : f32
    %42 = arith.maximumf %cst_20, %9 : f32
    %43 = arith.subf %10, %9 : f32
    %cst_21 = arith.constant 4.000000e+00 : f32
    %44 = arith.subf %41, %cst_21 : f32
    %45 = arith.mulf %43, %44 : f32
    %cst_22 = arith.constant 0.0909090936 : f32
    %46 = arith.mulf %45, %cst_22 : f32
    %47 = arith.addf %9, %46 : f32
    %cst_23 = arith.constant 0.000000e+00 : f32
    %48 = arith.maximumf %cst_23, %47 : f32
    %49 = arith.subf %11, %10 : f32
    %cst_24 = arith.constant 1.500000e+01 : f32
    %50 = arith.subf %41, %cst_24 : f32
    %51 = arith.mulf %49, %50 : f32
    %cst_25 = arith.constant 0.0666666701 : f32
    %52 = arith.mulf %51, %cst_25 : f32
    %53 = arith.addf %10, %52 : f32
    %cst_26 = arith.constant 0.000000e+00 : f32
    %54 = arith.maximumf %cst_26, %53 : f32
    %cst_27 = arith.constant 0.000000e+00 : f32
    %55 = arith.maximumf %cst_27, %11 : f32
    %cst_28 = arith.constant 4.000000e+00 : f32
    %56 = arith.cmpf ole, %41, %cst_28 : f32
    %cst_29 = arith.constant 1.500000e+01 : f32
    %57 = arith.cmpf ole, %41, %cst_29 : f32
    %cst_30 = arith.constant 3.000000e+01 : f32
    %58 = arith.cmpf ole, %41, %cst_30 : f32
    %59 = arith.select %58, %54, %55 : f32
    %60 = arith.select %57, %48, %59 : f32
    %61 = arith.select %56, %42, %60 : f32
    %cst_31 = arith.constant 1.000000e+00 : f32
    %62 = arith.addf %8, %cst_31 : f32
    %cst_32 = arith.constant 0.000000e+00 : f32
    %63 = arith.maximumf %cst_32, %12 : f32
    %64 = arith.subf %13, %12 : f32
    %cst_33 = arith.constant 4.000000e+00 : f32
    %65 = arith.subf %62, %cst_33 : f32
    %66 = arith.mulf %64, %65 : f32
    %cst_34 = arith.constant 0.0909090936 : f32
    %67 = arith.mulf %66, %cst_34 : f32
    %68 = arith.addf %12, %67 : f32
    %cst_35 = arith.constant 0.000000e+00 : f32
    %69 = arith.maximumf %cst_35, %68 : f32
    %70 = arith.subf %14, %13 : f32
    %cst_36 = arith.constant 1.500000e+01 : f32
    %71 = arith.subf %62, %cst_36 : f32
    %72 = arith.mulf %70, %71 : f32
    %cst_37 = arith.constant 0.0666666701 : f32
    %73 = arith.mulf %72, %cst_37 : f32
    %74 = arith.addf %13, %73 : f32
    %cst_38 = arith.constant 0.000000e+00 : f32
    %75 = arith.maximumf %cst_38, %74 : f32
    %76 = arith.subf %15, %14 : f32
    %cst_39 = arith.constant 3.000000e+01 : f32
    %77 = arith.subf %62, %cst_39 : f32
    %78 = arith.mulf %76, %77 : f32
    %cst_40 = arith.constant 5.000000e-02 : f32
    %79 = arith.mulf %78, %cst_40 : f32
    %80 = arith.addf %14, %79 : f32
    %cst_41 = arith.constant 0.000000e+00 : f32
    %81 = arith.maximumf %cst_41, %80 : f32
    %cst_42 = arith.constant 4.000000e+00 : f32
    %82 = arith.cmpf ole, %62, %cst_42 : f32
    %cst_43 = arith.constant 1.500000e+01 : f32
    %83 = arith.cmpf ole, %62, %cst_43 : f32
    %cst_44 = arith.constant 3.000000e+01 : f32
    %84 = arith.cmpf ole, %62, %cst_44 : f32
    %85 = arith.select %84, %75, %81 : f32
    %86 = arith.select %83, %69, %85 : f32
    %87 = arith.select %82, %63, %86 : f32
    %cst_45 = arith.constant 1.000000e+00 : f32
    %88 = arith.subf %cst_45, %16 : f32
    %89 = arith.mulf %88, %1 : f32
    %90 = arith.addf %2, %1 : f32
    %91 = arith.mulf %40, %90 : f32
    %92 = arith.mulf %91, %0 : f32
    %93 = arith.mulf %92, %20 : f32
    %94 = arith.addf %89, %93 : f32
    %95 = arith.mulf %61, %6 : f32
    %96 = arith.mulf %95, %20 : f32
    %cst_46 = arith.constant 1.000000e+00 : f32
    %97 = arith.subf %cst_46, %96 : f32
    %98 = arith.mulf %97, %4 : f32
    %99 = arith.mulf %88, %5 : f32
    %100 = arith.addf %6, %5 : f32
    %101 = arith.mulf %61, %100 : f32
    %102 = arith.mulf %101, %4 : f32
    %103 = arith.mulf %102, %20 : f32
    %104 = arith.addf %99, %103 : f32
    %cst_47 = arith.constant 1.000000e+00 : f32
    %105 = arith.subf %cst_47, %87 : f32
    %106 = arith.mulf %105, %6 : f32
    %107 = arith.mulf %16, %94 : f32
    %108 = arith.addf %106, %107 : f32
    %109 = arith.mulf %87, %6 : f32
    %110 = arith.addf %7, %109 : f32
    %c0_48 = arith.constant 0 : index
    %111 = memref.load %arg3[%c0_48] : memref<4xf32, #tpu.memory_space<smem>>
    memref.store %98, %arg3[%c0_48] : memref<4xf32, #tpu.memory_space<smem>>
    %c1_49 = arith.constant 1 : index
    %112 = memref.load %arg3[%c1_49] : memref<4xf32, #tpu.memory_space<smem>>
    memref.store %104, %arg3[%c1_49] : memref<4xf32, #tpu.memory_space<smem>>
    %c2_50 = arith.constant 2 : index
    %113 = memref.load %arg3[%c2_50] : memref<4xf32, #tpu.memory_space<smem>>
    memref.store %108, %arg3[%c2_50] : memref<4xf32, #tpu.memory_space<smem>>
    %c3_51 = arith.constant 3 : index
    %114 = memref.load %arg3[%c3_51] : memref<4xf32, #tpu.memory_space<smem>>
    memref.store %110, %arg3[%c3_51] : memref<4xf32, #tpu.memory_space<smem>>
    return
  }
}

</mosaic_0001>

<llo_original>
// kernel: tpu_custom_call.1
$region0: #{tpu_custom_call.1}
  #allocation0 [shape = 'u32[]', space=smem, size = 0x4, offset = 0x4, fixed_abs, tag = 'smem constant byte address 0x4 - core index']
  #allocation1 [shape = 'u32[144,128]{1,0:T(1,128)}', space=vmem, size = 0x12000, scoped, tag = 'internal scratch']
  #allocation2 [shape = 'f32[1]{0:T(128)S(6)}', space=smem, size = 0x200, scoped, tag = 'scoped memory for tpu_custom_call.1']
  %s0 = inlined_call_operand.vmem [shape: f32[9], index: 0, kind: input, shape index: {}]
  %s1 = inlined_call_operand.vmem [shape: f32[8], index: 1, kind: input, shape index: {}]
  %s2 = inlined_call_operand.<no memory space> [shape: f32[1], index: 2, kind: input, shape index: {}]
  %s3 = inlined_call_operand.hbm [shape: f32[4], index: 3, kind: output, shape index: {}]
  %s4 = sld [smem:[#allocation0]]
  $region30: #{tpu_custom_call.1} parent=0
    _
  %s6 = ssub.s32 1, %s4
  %s7 = scalar_select 0, %s6, %s4
  %8 = sst [smem:[#allocation2]] %s2
  $region1: #{tpu_custom_call.1} parent=0
    #allocation3 [shape = 'u8[512]{0}', space=smem, size = 0x200, scoped, tag = 'input window, operand 0, single buffered']
    #allocation4 [shape = 's32[1]{0}', space=sflag, size = 0x4, scoped, tag = 'scoped memory for tpu_custom_call.1']
    #allocation5 [shape = 's32[1]{0}', space=sflag, size = 0x4, scoped, tag = 'scoped memory for tpu_custom_call.1']
    #allocation6 [shape = 'u8[512]{0}', space=smem, size = 0x200, scoped, tag = 'input window, operand 1, single buffered']
    #allocation7 [shape = 's32[1]{0}', space=sflag, size = 0x4, scoped, tag = 'scoped memory for tpu_custom_call.1']
    #allocation8 [shape = 'u8[512]{0}', space=smem, size = 0x200, scoped, tag = 'output window, operand 0, single buffered']
    %9 = vsyncpa [#allocation5], 0
    %10 = vsyncpa [#allocation7], 0
    %11 = vsyncpa [#allocation4], 0
    // Predicated region
    $region2: #{tpu_custom_call.1} parent=1 // pred_check
      _
    $region3: #{tpu_custom_call.1} parent=1 // pred_check_branch
      %13 = sbr.rel (0) target = $region5
    $region4: #{tpu_custom_call.1} parent=1 // pred_region
      %s15 = ssub.s32 16, 16
      %16 = vsyncadd [#allocation5], %s15
      %s18 = sshll.u32 %s0, 4
      %s19 = int_to_ptr.vmem [resolvable:$true] %s18
      %21 = dma.vmem_to_smem %s19, 16, [#allocation3], [#allocation5]
    $region5: #{tpu_custom_call.1} parent=1 // pred_fallthru
      _
    // Predicated region
    $region6: #{tpu_custom_call.1} parent=1 // pred_check
      _
    $region7: #{tpu_custom_call.1} parent=1 // pred_check_branch
      %23 = sbr.rel (0) target = $region9
    $region8: #{tpu_custom_call.1} parent=1 // pred_region
      %s25 = ssub.s32 16, 16
      %26 = vsyncadd [#allocation7], %s25
      %s28 = sshll.u32 %s1, 4
      %s29 = int_to_ptr.vmem [resolvable:$true] %s28
      %31 = dma.vmem_to_smem %s29, 16, [#allocation6], [#allocation7]
    $region9: #{tpu_custom_call.1} parent=1 // pred_fallthru
      _
    // Predicated region
    $region10: #{tpu_custom_call.1} parent=1 // pred_check
      _
    $region11: #{tpu_custom_call.1} parent=1 // pred_check_branch
      %33 = sbr.rel (0) target = $region13
    $region12: #{tpu_custom_call.1} parent=1 // pred_region
      _
    $region13: #{tpu_custom_call.1} parent=1 // pred_fallthru
      _
    // Predicated region
    $region14: #{tpu_custom_call.1} parent=1 // pred_check
      _
    $region15: #{tpu_custom_call.1} parent=1 // pred_check_branch
      %35 = sbr.rel (0) target = $region17
    $region16: #{tpu_custom_call.1} parent=1 // pred_region
      %36 = dma.done [#allocation5], 16
    $region17: #{tpu_custom_call.1} parent=1 // pred_fallthru
      _
    // Predicated region
    $region18: #{tpu_custom_call.1} parent=1 // pred_check
      _
    $region19: #{tpu_custom_call.1} parent=1 // pred_check_branch
      %38 = sbr.rel (0) target = $region21
    $region20: #{tpu_custom_call.1} parent=1 // pred_region
      %39 = dma.done [#allocation7], 16
    $region21: #{tpu_custom_call.1} parent=1 // pred_fallthru
      _
    %40 = sfence
    %s41 = sld [smem:[#allocation3]]
    %s42 = sld [smem:[#allocation3 + $0x1]]
    %s43 = sld [smem:[#allocation3 + $0x2]]
    %s44 = sld [smem:[#allocation3 + $0x3]]
    %s45 = sld [smem:[#allocation3 + $0x4]]
    %s46 = sld [smem:[#allocation3 + $0x5]]
    %s47 = sld [smem:[#allocation3 + $0x6]]
    %s48 = sld [smem:[#allocation3 + $0x7]]
    %s49 = sld [smem:[#allocation3 + $0x8]]
    %s50 = sld [smem:[#allocation6]]
    %s51 = sld [smem:[#allocation6 + $0x1]]
    %s52 = sld [smem:[#allocation6 + $0x2]]
    %s53 = sld [smem:[#allocation6 + $0x4]]
    %s54 = sld [smem:[#allocation6 + $0x5]]
    %s55 = sld [smem:[#allocation6 + $0x6]]
    %s56 = sld [smem:[#allocation6 + $0x7]]
    %s57 = sld [smem:[#allocation2]]
    %s58 = sadd.f32 %s41, %s42
    %s59 = sadd.f32 %s58, %s43
    %s60 = sadd.f32 %s59, %s44
    %v61 = vstv %s60
    %v62 = vrcp.pop %v61
    %s63 = vtos %v62
    %s64 = smax.f32 %s50, 0.0
    %s65 = ssub.f32 %s51, %s50
    %s66 = ssub.f32 %s49, 4.0
    %s67 = smul.f32 %s65, %s66
    %s68 = smul.f32 %s67, 0.09090909
    %s69 = sadd.f32 %s50, %s68
    %s70 = smax.f32 %s69, 0.0
    %s71 = ssub.f32 %s52, %s51
    %s72 = ssub.f32 %s49, 15.0
    %s73 = smul.f32 %s71, %s72
    %s74 = smul.f32 %s73, 0.06666667
    %s75 = sadd.f32 %s51, %s74
    %s76 = smax.f32 %s75, 0.0
    %s77 = smax.f32 %s52, 0.0
    %p78 = scmp.le.f32.partialorder %s49, 4.0
    %p79 = scmp.le.f32.partialorder %s49, 15.0
    %p80 = scmp.le.f32.partialorder %s49, 30.0
    %s81 = scalar_select %p80, %s76, %s77
    %s82 = scalar_select %p79, %s70, %s81
    %s83 = scalar_select %p78, %s64, %s82
    %s84 = sadd.f32 %s49, 1.0
    %s85 = ssub.f32 %s84, 4.0
    %s86 = smul.f32 %s65, %s85
    %s87 = smul.f32 %s86, 0.09090909
    %s88 = sadd.f32 %s50, %s87
    %s89 = smax.f32 %s88, 0.0
    %s90 = ssub.f32 %s84, 15.0
    %s91 = smul.f32 %s71, %s90
    %s92 = smul.f32 %s91, 0.06666667
    %s93 = sadd.f32 %s51, %s92
    %s94 = smax.f32 %s93, 0.0
    %p95 = scmp.le.f32.partialorder %s84, 4.0
    %p96 = scmp.le.f32.partialorder %s84, 15.0
    %p97 = scmp.le.f32.partialorder %s84, 30.0
    %s98 = scalar_select %p97, %s94, %s77
    %s99 = scalar_select %p96, %s89, %s98
    %s100 = scalar_select %p95, %s64, %s99
    %s101 = smax.f32 %s53, 0.0
    %s102 = ssub.f32 %s54, %s53
    %s103 = smul.f32 %s102, %s85
    %s104 = smul.f32 %s103, 0.09090909
    %s105 = sadd.f32 %s53, %s104
    %s106 = smax.f32 %s105, 0.0
    %s107 = ssub.f32 %s55, %s54
    %s108 = smul.f32 %s107, %s90
    %s109 = smul.f32 %s108, 0.06666667
    %s110 = sadd.f32 %s54, %s109
    %s111 = smax.f32 %s110, 0.0
    %s112 = ssub.f32 %s56, %s55
    %s113 = ssub.f32 %s84, 30.0
    %s114 = smul.f32 %s112, %s113
    %s115 = smul.f32 %s114, 0.05
    %s116 = sadd.f32 %s55, %s115
    %s117 = smax.f32 %s116, 0.0
    %s118 = scalar_select %p97, %s111, %s117
    %s119 = scalar_select %p96, %s106, %s118
    %s120 = scalar_select %p95, %s101, %s119
    %s121 = ssub.f32 1.0, %s57
    %s122 = smul.f32 %s121, %s42
    %s123 = sadd.f32 %s43, %s42
    %s124 = smul.f32 %s83, %s123
    %s125 = smul.f32 %s124, %s41
    %s126 = smul.f32 %s125, %s63
    %s127 = sadd.f32 %s122, %s126
    %s128 = smul.f32 %s100, %s47
    %s129 = smul.f32 %s128, %s63
    %s130 = ssub.f32 1.0, %s129
    %s131 = smul.f32 %s130, %s45
    %s132 = smul.f32 %s121, %s46
    %s133 = sadd.f32 %s47, %s46
    %s134 = smul.f32 %s100, %s133
    %s135 = smul.f32 %s134, %s45
    %s136 = smul.f32 %s135, %s63
    %s137 = sadd.f32 %s132, %s136
    %s138 = ssub.f32 1.0, %s120
    %s139 = smul.f32 %s138, %s47
    %s140 = smul.f32 %s57, %s127
    %s141 = sadd.f32 %s139, %s140
    %s142 = smul.f32 %s120, %s47
    %s143 = sadd.f32 %s48, %s142
    %s144 = scalar_lea.smem [#allocation8], 0
    %145 = sst [smem:[%s144]] %s131
    %s146 = scalar_lea.smem [#allocation8], 1
    %147 = sst [smem:[%s146]] %s137
    %s148 = scalar_lea.smem [#allocation8], 2
    %149 = sst [smem:[%s148]] %s141
    %s150 = scalar_lea.smem [#allocation8], 3
    %151 = sst [smem:[%s150]] %s143
    // Predicated region
    $region22: #{tpu_custom_call.1} parent=1 // pred_check
      _
    $region23: #{tpu_custom_call.1} parent=1 // pred_check_branch
      %153 = sbr.rel (0) target = $region25
    $region24: #{tpu_custom_call.1} parent=1 // pred_region
      %s155 = ssub.s32 16, 16
      %156 = vsyncadd [#allocation4], %s155
      %159 = dma.smem_to_hbm [#allocation8], 16, %s3, [#allocation4]
    $region25: #{tpu_custom_call.1} parent=1 // pred_fallthru
      _
    // Predicated region
    $region26: #{tpu_custom_call.1} parent=1 // pred_check
      _
    $region27: #{tpu_custom_call.1} parent=1 // pred_check_branch
      %161 = sbr.rel (0) target = $region29
    $region28: #{tpu_custom_call.1} parent=1 // pred_region
      %162 = dma.done [#allocation4], 16
    $region29: #{tpu_custom_call.1} parent=1 // pred_fallthru
      _
    %163 = sfence
    %164 = vsyncpa [#allocation4], 1
    %165 = vsyncpa [#allocation5], 1
    %166 = vsyncpa [#allocation7], 1

</llo_original>
